<compile_context>
chip_gen: v6e
topology: v6e:2x2x1
jax: 0.10.0
libtpu: 0.0.40
codegen_flags: <defaults>
</compile_context>

<pallas_src>
import functools

import numpy as np
import jax
import jax.numpy as jnp
from jax.experimental import pallas as pl
from jax.experimental.pallas import tpu as pltpu

_BN_EPS = 1e-5
_LANE = 128                       # lane width: spatial tiles are multiples of this
_MAX_TILE_S = 32768               # hard cap on columns per grid step
_VMEM_TILE_BUDGET = 16 * 1024 * 1024   # ~16 MiB for double-buffered tiles (v7x-safe)


# ---------------------------------------------------------------------------
# Pallas kernels
# ---------------------------------------------------------------------------
def _conv_stats_kernel(x_ref, w_ref, stats_ref):
    """Pass 1: y0 = W @ x (no bias) for one (Cin, tile_S) tile; accumulate
    per-channel sum / sum-of-squares into the resident stats block.

    x_ref : (Cin, tile_S) f32      w_ref : (Cout, Cin) bf16
    stats_ref : (Cout, 2) f32  -- col 0 = sum(y0), col 1 = sum(y0^2)
    """
    si = pl.program_id(1)

    @pl.when(si == 0)
    def _():
        stats_ref[...] = jnp.zeros_like(stats_ref)

    y0 = jnp.dot(w_ref[...], x_ref[...].astype(jnp.bfloat16),
                 preferred_element_type=jnp.float32)          # (Cout, tile_S)
    s = jnp.sum(y0, axis=1, keepdims=True)                    # (Cout, 1)
    sq = jnp.sum(y0 * y0, axis=1, keepdims=True)              # (Cout, 1)
    stats_ref[...] += jnp.concatenate([s, sq], axis=1)        # (Cout, 2)


def _conv_bn_relu_kernel(x_ref, w_ref, scale_ref, shift_ref, o_ref):
    """Pass 2: recompute the 1x1x1 conv for the tile and fuse BN + ReLU.

    scale_ref / shift_ref : (Cout, 1) f32 (pre-folded in the wrapper)
    o_ref : (Cout, tile_S) f32 (lane-dense, un-padded channel count)
    """
    y0 = jnp.dot(w_ref[...], x_ref[...].astype(jnp.bfloat16),
                 preferred_element_type=jnp.float32)
    o_ref[...] = jnp.maximum(y0 * scale_ref[...] + shift_ref[...],
                             0.0).astype(o_ref.dtype)


# ---------------------------------------------------------------------------
# Forward pass (jitted wrapper: tile selection + two pallas_calls)
# ---------------------------------------------------------------------------
@functools.partial(jax.jit, static_argnames=("max_tile_s",))
def unet_grid_gating_signal3_forward(inputs, params, max_tile_s=_MAX_TILE_S):
    """inputs: (N, Cin, D, H, W) float32 NCDHW -> (N, Cout, D, H, W) float32."""
    n, cin, d, h, w_sp = inputs.shape
    cout = params["bn_gamma"].shape[0]
    s = d * h * w_sp

    # ---- spatial tile selection (static shape math) ----
    bytes_per_col = 2 * (cin + cout) * 4           # 2 buffers x (x + out) f32
    cap = min(int(max_tile_s), max(_LANE, _VMEM_TILE_BUDGET // bytes_per_col))
    cap = max(_LANE, cap - cap % _LANE)
    n_s_tiles = -(-s // cap)                       # cdiv
    tile_s = ((-(-s // n_s_tiles)) + _LANE - 1) // _LANE * _LANE
    s_pad = n_s_tiles * tile_s

    # NCDHW -> (N, Cin, S) is a free reshape; pad S only if tiles don't divide.
    x = inputs.reshape(n, cin, s)
    if s_pad != s:
        x = jnp.pad(x, ((0, 0), (0, 0), (0, s_pad - s)))

    # (Cout, Cin, 1, 1, 1) -> (Cout, Cin) bf16 MXU operand (tiny, cast once).
    w2d = params["conv_w"].reshape(cout, cin).astype(jnp.bfloat16)

    x_spec = pl.BlockSpec((None, cin, tile_s), lambda ni, si: (ni, 0, si))
    w_spec = pl.BlockSpec((cout, cin), lambda ni, si: (0, 0))
    vec_spec = pl.BlockSpec((cout, 1), lambda ni, si: (0, 0))

    # ---- pass 1: per-batch partial BN batch statistics ----
    stats = pl.pallas_call(
        _conv_stats_kernel,
        out_shape=jax.ShapeDtypeStruct((n, cout, 2), jnp.float32),
        grid=(n, n_s_tiles),
        in_specs=[x_spec, w_spec],
        out_specs=pl.BlockSpec((None, cout, 2), lambda ni, si: (ni, 0, 0)),
        compiler_params=pltpu.CompilerParams(
            dimension_semantics=("parallel", "arbitrary"),
            vmem_limit_bytes=32 * 1024 * 1024),
    )(x, w2d)

    # ---- fold BN into per-channel scale/shift (tiny f32 math in the wrapper) ----
    # Padded columns contributed exactly 0 (no bias added), so divide by the
    # true element count.  The conv bias cancels against the BN mean
    # subtraction in training mode, so it never appears in the kernels.
    count = float(n * s)
    sums = jnp.sum(stats, axis=0)                  # (Cout, 2)
    mean0 = sums[:, 0] / count
    ex2 = sums[:, 1] / count
    var = jnp.maximum(ex2 - mean0 * mean0, 0.0)    # guard f32 cancellation
    scale = params["bn_gamma"] * jax.lax.rsqrt(var + _BN_EPS)
    shift = params["bn_beta"] - mean0 * scale
    scale = scale.reshape(cout, 1).astype(jnp.float32)
    shift = shift.reshape(cout, 1).astype(jnp.float32)

    # ---- pass 2: conv + fused BN(scale/shift) + ReLU, un-padded channels ----
    y = pl.pallas_call(
        _conv_bn_relu_kernel,
        out_shape=jax.ShapeDtypeStruct((n, cout, s_pad), jnp.float32),
        grid=(n, n_s_tiles),
        in_specs=[x_spec, w_spec, vec_spec, vec_spec],
        out_specs=pl.BlockSpec((None, cout, tile_s), lambda ni, si: (ni, 0, si)),
        compiler_params=pltpu.CompilerParams(
            dimension_semantics=("parallel", "parallel"),
            vmem_limit_bytes=32 * 1024 * 1024),
    )(x, w2d, scale, shift)

    if s_pad != s:
        y = y[:, :, :s]
    return y.reshape(n, cout, d, h, w_sp)


# ---------------------------------------------------------------------------
# Deterministic synthetic parameters (shapes follow the PyTorch module)
# ---------------------------------------------------------------------------
def init_params(key, in_size, out_size):
    k1, k2, k3 = jax.random.split(key, 3)
    std = float(np.sqrt(2.0 / in_size))       # kaiming fan_in for a 1x1x1 Conv3d
    return {
        "conv_w": std * jax.random.normal(k1, (out_size, in_size, 1, 1, 1), jnp.float32),
        "conv_b": 0.1 * jax.random.normal(k2, (out_size,), jnp.float32),
        "bn_gamma": 1.0 + 0.02 * jax.random.normal(k3, (out_size,), jnp.float32),
        "bn_beta": jnp.zeros((out_size,), jnp.float32),
    }


# ---------------------------------------------------------------------------
# Pure-JAX f32 reference (correctness check only)
# ---------------------------------------------------------------------------
def reference_forward(inputs, params):
    cout = params["conv_b"].shape[0]
    w2d = params["conv_w"].reshape(cout, -1)                     # (Cout, Cin)
    y = jnp.einsum("ncdhw,oc->nodhw", inputs, w2d,
                   precision=jax.lax.Precision.HIGHEST)
    y = y + params["conv_b"][None, :, None, None, None]
    mean = jnp.mean(y, axis=(0, 2, 3, 4), keepdims=True)
    var = jnp.mean((y - mean) ** 2, axis=(0, 2, 3, 4), keepdims=True)
    y = (y - mean) * jax.lax.rsqrt(var + _BN_EPS)
    y = y * params["bn_gamma"][None, :, None, None, None] \
        + params["bn_beta"][None, :, None, None, None]
    return jnp.maximum(y, 0.0)


if __name__ == "__main__":
    # UnetGridGatingSignal3(in_size=8, out_size=4), input (N, C, D, H, W)
    in_size, out_size = 8, 4
    n, d, h, w = 2, 5, 8, 8            # S = 320: exercises spatial-tile padding
    key = jax.random.PRNGKey(0)
    kx, kp = jax.random.split(key)
    inputs = jax.random.normal(kx, (n, in_size, d, h, w), jnp.float32)
    params = init_params(kp, in_size, out_size)

    ref = jax.block_until_ready(reference_forward(inputs, params))

    # (a) default large-tile path, (b) forced small tile -> multi-tile S grid
    #     exercising the stats accumulation across the "arbitrary" axis.
    for tile_cap in (_MAX_TILE_S, 128):
        out = jax.block_until_ready(
            unet_grid_gating_signal3_forward(inputs, params, max_tile_s=tile_cap))
        assert out.shape == (n, out_size, d, h, w), out.shape
        max_err = float(jnp.max(jnp.abs(out - ref)))
        # bf16 MXU operands + f32 accumulation vs f32 HIGHEST reference.
        assert np.allclose(np.asarray(out), np.asarray(ref),
                           atol=3e-2, rtol=3e-2), (tile_cap, max_err)

    print("KERNEL_OK")
</pallas_src>

<mosaic_0001>
module attributes {stable_mosaic.version = 11 : i64} {
  func.func @_conv_stats_kernel(%arg0: i32, %arg1: i32, %arg2: memref<1x8x384xf32, #tpu.memory_space<vmem>>, %arg3: memref<4x8xbf16, #tpu.memory_space<vmem>>, %arg4: memref<1x4x2xf32, #tpu.memory_space<vmem>>) attributes {dimension_semantics = [#tpu.dimension_semantics<parallel>, #tpu.dimension_semantics<arbitrary>], iteration_bounds = array<i64: 2, 1>, scalar_prefetch = 0 : i64, scratch_operands = 0 : i64, tpu.core_type = #tpu.core_type<tc>, window_params = [{transform_indices = @transform_0, window_bounds = array<i64: 1, 8, 384>}, {pipeline_mode = #tpu.pipeline_mode<synchronous>, transform_indices = @transform_1, window_bounds = array<i64: 4, 8>}, {transform_indices = @transform_2, window_bounds = array<i64: 1, 4, 2>}]} {
    %c0_i32 = arith.constant 0 : i32
    %0 = arith.cmpi eq, %arg1, %c0_i32 : i32
    %1 = arith.extui %0 : i1 to i32
    %c0_i32_0 = arith.constant 0 : i32
    %2 = arith.cmpi ne, %1, %c0_i32_0 : i32
    scf.if %2 {
      %cst_13 = arith.constant 0.000000e+00 : f32
      %20 = vector.broadcast %cst_13 : f32 to vector<4x2xf32>
      %c0_14 = arith.constant 0 : index
      %c0_15 = arith.constant 0 : index
      %c0_16 = arith.constant 0 : index
      %21 = vector.load %arg4[%c0_14, %c0_15, %c0_16] : memref<1x4x2xf32, #tpu.memory_space<vmem>>, vector<1x4x2xf32>
      %22 = vector.shape_cast %21 : vector<1x4x2xf32> to vector<4x2xf32>
      %23 = vector.shape_cast %20 : vector<4x2xf32> to vector<1x4x2xf32>
      tpu.vector_store %arg4[%c0_14, %c0_15, %c0_16], %23 {strides = array<i32>} : memref<1x4x2xf32, #tpu.memory_space<vmem>>, vector<1x4x2xf32>,
    } else {
    }
    %c0 = arith.constant 0 : index
    %c0_1 = arith.constant 0 : index
    %3 = vector.load %arg3[%c0, %c0_1] : memref<4x8xbf16, #tpu.memory_space<vmem>>, vector<4x8xbf16>
    %c0_2 = arith.constant 0 : index
    %c0_3 = arith.constant 0 : index
    %c0_4 = arith.constant 0 : index
    %4 = vector.load %arg2[%c0_2, %c0_3, %c0_4] : memref<1x8x384xf32, #tpu.memory_space<vmem>>, vector<1x8x384xf32>
    %5 = vector.shape_cast %4 : vector<1x8x384xf32> to vector<8x384xf32>
    %6 = arith.truncf %5 : vector<8x384xf32> to vector<8x384xbf16>
    %cst = arith.constant dense<0.000000e+00> : vector<4x384xf32>
    %7 = tpu.matmul %3, %6, %cst {dimension_numbers = #tpu.dot_dimension_numbers<[1], [0], [0], [1], [0, 0, 1, 1], [], []>} : vector<4x8xbf16>, vector<8x384xbf16>, vector<4x384xf32> -> vector<4x384xf32>
    %cst_5 = arith.constant dense<0.000000e+00> : vector<4xf32>
    %8 = vector.multi_reduction <add>, %7, %cst_5 [1] : vector<4x384xf32> to vector<4xf32>
    %9 = vector.shape_cast %8 : vector<4xf32> to vector<4x1xf32>
    %10 = arith.mulf %7, %7 : vector<4x384xf32>
    %cst_6 = arith.constant dense<0.000000e+00> : vector<4xf32>
    %11 = vector.multi_reduction <add>, %10, %cst_6 [1] : vector<4x384xf32> to vector<4xf32>
    %12 = vector.shape_cast %11 : vector<4xf32> to vector<4x1xf32>
    %c0_7 = arith.constant 0 : index
    %c0_8 = arith.constant 0 : index
    %c0_9 = arith.constant 0 : index
    %13 = vector.load %arg4[%c0_7, %c0_8, %c0_9] : memref<1x4x2xf32, #tpu.memory_space<vmem>>, vector<1x4x2xf32>
    %14 = vector.shape_cast %13 : vector<1x4x2xf32> to vector<4x2xf32>
    %15 = tpu.concatenate %9, %12 in 1 : vector<4x1xf32>, vector<4x1xf32> -> vector<4x2xf32>
    %16 = arith.addf %14, %15 : vector<4x2xf32>
    %c0_10 = arith.constant 0 : index
    %c0_11 = arith.constant 0 : index
    %c0_12 = arith.constant 0 : index
    %17 = vector.load %arg4[%c0_10, %c0_11, %c0_12] : memref<1x4x2xf32, #tpu.memory_space<vmem>>, vector<1x4x2xf32>
    %18 = vector.shape_cast %17 : vector<1x4x2xf32> to vector<4x2xf32>
    %19 = vector.shape_cast %16 : vector<4x2xf32> to vector<1x4x2xf32>
    tpu.vector_store %arg4[%c0_10, %c0_11, %c0_12], %19 {strides = array<i32>} : memref<1x4x2xf32, #tpu.memory_space<vmem>>, vector<1x4x2xf32>,
    return
  }
  func.func @transform_0(%arg0: i32, %arg1: i32) -> (i32, i32, i32) {
    %c0_i32 = arith.constant 0 : i32
    %c0_i32_0 = arith.constant 0 : i32
    return %arg0, %c0_i32, %arg1 : i32, i32, i32
  }
  func.func @transform_1(%arg0: i32, %arg1: i32) -> (i32, i32) {
    %c0_i32 = arith.constant 0 : i32
    %c0_i32_0 = arith.constant 0 : i32
    %c0_i32_1 = arith.constant 0 : i32
    return %c0_i32, %c0_i32_0 : i32, i32
  }
  func.func @transform_2(%arg0: i32, %arg1: i32) -> (i32, i32, i32) {
    %c0_i32 = arith.constant 0 : i32
    %c0_i32_0 = arith.constant 0 : i32
    %c0_i32_1 = arith.constant 0 : i32
    return %arg0, %c0_i32, %c0_i32_0 : i32, i32, i32
  }
}

module attributes {stable_mosaic.version = 11 : i64} {
  func.func @_conv_bn_relu_kernel(%arg0: i32, %arg1: i32, %arg2: memref<1x8x384xf32, #tpu.memory_space<vmem>>, %arg3: memref<4x8xbf16, #tpu.memory_space<vmem>>, %arg4: memref<4x1xf32, #tpu.memory_space<vmem>>, %arg5: memref<4x1xf32, #tpu.memory_space<vmem>>, %arg6: memref<1x4x384xf32, #tpu.memory_space<vmem>>) attributes {dimension_semantics = [#tpu.dimension_semantics<parallel>, #tpu.dimension_semantics<parallel>], iteration_bounds = array<i64: 2, 1>, scalar_prefetch = 0 : i64, scratch_operands = 0 : i64, tpu.core_type = #tpu.core_type<tc>, window_params = [{transform_indices = @transform_0, window_bounds = array<i64: 1, 8, 384>}, {pipeline_mode = #tpu.pipeline_mode<synchronous>, transform_indices = @transform_1, window_bounds = array<i64: 4, 8>}, {pipeline_mode = #tpu.pipeline_mode<synchronous>, transform_indices = @transform_2, window_bounds = array<i64: 4, 1>}, {pipeline_mode = #tpu.pipeline_mode<synchronous>, transform_indices = @transform_3, window_bounds = array<i64: 4, 1>}, {transform_indices = @transform_4, window_bounds = array<i64: 1, 4, 384>}]} {
    %c0 = arith.constant 0 : index
    %c0_0 = arith.constant 0 : index
    %0 = vector.load %arg3[%c0, %c0_0] : memref<4x8xbf16, #tpu.memory_space<vmem>>, vector<4x8xbf16>
    %c0_1 = arith.constant 0 : index
    %c0_2 = arith.constant 0 : index
    %c0_3 = arith.constant 0 : index
    %1 = vector.load %arg2[%c0_1, %c0_2, %c0_3] : memref<1x8x384xf32, #tpu.memory_space<vmem>>, vector<1x8x384xf32>
    %2 = vector.shape_cast %1 : vector<1x8x384xf32> to vector<8x384xf32>
    %3 = arith.truncf %2 : vector<8x384xf32> to vector<8x384xbf16>
    %cst = arith.constant dense<0.000000e+00> : vector<4x384xf32>
    %4 = tpu.matmul %0, %3, %cst {dimension_numbers = #tpu.dot_dimension_numbers<[1], [0], [0], [1], [0, 0, 1, 1], [], []>} : vector<4x8xbf16>, vector<8x384xbf16>, vector<4x384xf32> -> vector<4x384xf32>
    %c0_4 = arith.constant 0 : index
    %c0_5 = arith.constant 0 : index
    %5 = vector.load %arg4[%c0_4, %c0_5] : memref<4x1xf32, #tpu.memory_space<vmem>>, vector<4x1xf32>
    %6 = vector.broadcast %5 : vector<4x1xf32> to vector<4x384xf32>
    %7 = arith.mulf %4, %6 : vector<4x384xf32>
    %c0_6 = arith.constant 0 : index
    %c0_7 = arith.constant 0 : index
    %8 = vector.load %arg5[%c0_6, %c0_7] : memref<4x1xf32, #tpu.memory_space<vmem>>, vector<4x1xf32>
    %9 = vector.broadcast %8 : vector<4x1xf32> to vector<4x384xf32>
    %10 = arith.addf %7, %9 : vector<4x384xf32>
    %cst_8 = arith.constant 0.000000e+00 : f32
    %11 = vector.broadcast %cst_8 : f32 to vector<4x384xf32>
    %12 = arith.maximumf %10, %11 : vector<4x384xf32>
    %c0_9 = arith.constant 0 : index
    %c0_10 = arith.constant 0 : index
    %c0_11 = arith.constant 0 : index
    %13 = vector.load %arg6[%c0_9, %c0_10, %c0_11] : memref<1x4x384xf32, #tpu.memory_space<vmem>>, vector<1x4x384xf32>
    %14 = vector.shape_cast %13 : vector<1x4x384xf32> to vector<4x384xf32>
    %15 = vector.shape_cast %12 : vector<4x384xf32> to vector<1x4x384xf32>
    tpu.vector_store %arg6[%c0_9, %c0_10, %c0_11], %15 {strides = array<i32>} : memref<1x4x384xf32, #tpu.memory_space<vmem>>, vector<1x4x384xf32>,
    return
  }
  func.func @transform_0(%arg0: i32, %arg1: i32) -> (i32, i32, i32) {
    %c0_i32 = arith.constant 0 : i32
    %c0_i32_0 = arith.constant 0 : i32
    return %arg0, %c0_i32, %arg1 : i32, i32, i32
  }
  func.func @transform_1(%arg0: i32, %arg1: i32) -> (i32, i32) {
    %c0_i32 = arith.constant 0 : i32
    %c0_i32_0 = arith.constant 0 : i32
    %c0_i32_1 = arith.constant 0 : i32
    return %c0_i32, %c0_i32_0 : i32, i32
  }
  func.func @transform_2(%arg0: i32, %arg1: i32) -> (i32, i32) {
    %c0_i32 = arith.constant 0 : i32
    %c0_i32_0 = arith.constant 0 : i32
    %c0_i32_1 = arith.constant 0 : i32
    return %c0_i32, %c0_i32_0 : i32, i32
  }
  func.func @transform_3(%arg0: i32, %arg1: i32) -> (i32, i32) {
    %c0_i32 = arith.constant 0 : i32
    %c0_i32_0 = arith.constant 0 : i32
    %c0_i32_1 = arith.constant 0 : i32
    return %c0_i32, %c0_i32_0 : i32, i32
  }
  func.func @transform_4(%arg0: i32, %arg1: i32) -> (i32, i32, i32) {
    %c0_i32 = arith.constant 0 : i32
    %c0_i32_0 = arith.constant 0 : i32
    return %arg0, %c0_i32, %arg1 : i32, i32, i32
  }
}

</mosaic_0001>

<llo_original>
// kernel: unet_grid_gating_signal3_forward.3
$region0: #{unet_grid_gating_signal3_forward.3}
  #allocation0 [shape = 'u32[]', space=smem, size = 0x4, offset = 0x4, fixed_abs, tag = 'smem constant byte address 0x4 - core index']
  #allocation1 [shape = 'u32[144,128]{1,0:T(1,128)}', space=vmem, size = 0x12000, scoped, tag = 'internal scratch']
  %s0 = inlined_call_operand.vmem [shape: f32[2,8,384], index: 0, kind: input, shape index: {}]
  %s1 = inlined_call_operand.vmem [shape: bf16[4,8], index: 1, kind: input, shape index: {}]
  %s2 = inlined_call_operand.vmem [shape: f32[4,1], index: 2, kind: input, shape index: {}]
  %s3 = inlined_call_operand.vmem [shape: f32[4,1], index: 3, kind: input, shape index: {}]
  %s4 = inlined_call_operand.vmem [shape: f32[2,4,384], index: 4, kind: output, shape index: {}]
  %s5 = sld [smem:[#allocation0]]
  $region49: #{unet_grid_gating_signal3_forward.3} parent=0
    _
  %s7 = ssub.s32 1, %s5
  %s8 = scalar_select 0, %s7, %s5
  loop: start=0, step=1, limit=4
  $region2: #{unet_grid_gating_signal3_forward.3} parent=0 // loop_pre_header
    _
  $region3: #{unet_grid_gating_signal3_forward.3} parent=0 // loop_header
    %s10 = sphi 0, %s14
    %p11 = scmp.ge.s32.totalorder %s10, 4
    %s17 = sphi 0, %s29
    %s18 = sphi 0, %s25
    %s19 = sphi 0, %s17
    %s20 = sphi 0, %s18
    %s21 = sphi 0, %s19
    %s22 = sphi 0, %s20
    %s34 = sphi 0, %s36
    %s37 = sphi 0, %s34
    %s38 = sphi 0, %s37
    %s54 = sphi 0, %s38
    %s58 = sphi 0, %s58
    %s60 = sphi 0, %s58
    %s61 = sphi 0, %s60
    %s75 = sphi 0, %s61
    %s79 = sphi 0, %s79
    %s81 = sphi 0, %s79
    %s82 = sphi 0, %s81
    %s96 = sphi 0, %s82
    %s100 = sphi 0, %s100
    %s102 = sphi 0, %s100
    %s103 = sphi 0, %s102
    %s117 = sphi 0, %s103
    %s125 = sphi 0, %s127
    %s128 = sphi 0, %s125
    %s129 = sphi 0, %s128
    %s145 = sphi 0, %s129
  $region4: #{unet_grid_gating_signal3_forward.3} parent=0 // loop_header_branch
    %13 = sbr.rel (%p11) target = $region8
  $region5: #{unet_grid_gating_signal3_forward.3} parent=0 // loop_body
    %s15 = ssub.s32 %s10, 1
    %s16 = ssub.s32 %s10, 2
    %s23 = sadd.s32 1, %s18
    %p24 = scmp.ge.s32.totalorder %s23, 1
    %s25 = scalar_select %p24, 0, %s23
    %s26 = sadd.s32 1, %s17
    %s27 = scalar_select %p24, %s26, %s17
    %p28 = scmp.ge.s32.totalorder %s27, 2
    %s29 = scalar_select %p28, 0, %s27
    %s30 = ssub.s32 %s17, %s29
    %s31 = ssub.s32 %s18, %s25
    %s32 = sor.u32 %s30, %s31
    %p33 = scmp.eq.s32.totalorder %s32, 0
    %s35 = sadd.s32 %s34, 1
    %s36 = scalar_select %p33, %s34, %s35
    %p39 = pneg %p33
    %p40 = scmp.eq.s32.totalorder %s10, 1
    %p41 = por %p39, %p40
    %p42 = scmp.ne.s32.totalorder %s34, %s37
    %p43 = scmp.eq.s32.totalorder %s10, 0
    %p44 = por %p42, %p43
    %p45 = scmp.ne.s32.totalorder %s34, %s37
    %p46 = scmp.eq.s32.totalorder %s15, 1
    %p47 = por %p45, %p46
    %p48 = scmp.ne.s32.totalorder %s37, %s38
    %p49 = scmp.eq.s32.totalorder %s15, 0
    %p50 = por %p48, %p49
    %p51 = scmp.ne.s32.totalorder %s37, %s38
    %p52 = scmp.eq.s32.totalorder %s16, 1
    %p53 = por %p51, %p52
    %p55 = scmp.ne.s32.totalorder %s38, %s54
    %p56 = scmp.eq.s32.totalorder %s16, 0
    %p57 = por %p55, %p56
    %s59 = sadd.s32 %s58, 1
    %p62 = scmp.eq.s32.totalorder %s10, 1
    %p63 = scmp.ne.s32.totalorder %s58, %s60
    %p64 = scmp.eq.s32.totalorder %s10, 0
    %p65 = por %p63, %p64
    %p66 = scmp.ne.s32.totalorder %s58, %s60
    %p67 = scmp.eq.s32.totalorder %s15, 1
    %p68 = por %p66, %p67
    %p69 = scmp.ne.s32.totalorder %s60, %s61
    %p70 = scmp.eq.s32.totalorder %s15, 0
    %p71 = por %p69, %p70
    %p72 = scmp.ne.s32.totalorder %s60, %s61
    %p73 = scmp.eq.s32.totalorder %s16, 1
    %p74 = por %p72, %p73
    %p76 = scmp.ne.s32.totalorder %s61, %s75
    %p77 = scmp.eq.s32.totalorder %s16, 0
    %p78 = por %p76, %p77
    %s80 = sadd.s32 %s79, 1
    %p83 = scmp.eq.s32.totalorder %s10, 1
    %p84 = scmp.ne.s32.totalorder %s79, %s81
    %p85 = scmp.eq.s32.totalorder %s10, 0
    %p86 = por %p84, %p85
    %p87 = scmp.ne.s32.totalorder %s79, %s81
    %p88 = scmp.eq.s32.totalorder %s15, 1
    %p89 = por %p87, %p88
    %p90 = scmp.ne.s32.totalorder %s81, %s82
    %p91 = scmp.eq.s32.totalorder %s15, 0
    %p92 = por %p90, %p91
    %p93 = scmp.ne.s32.totalorder %s81, %s82
    %p94 = scmp.eq.s32.totalorder %s16, 1
    %p95 = por %p93, %p94
    %p97 = scmp.ne.s32.totalorder %s82, %s96
    %p98 = scmp.eq.s32.totalorder %s16, 0
    %p99 = por %p97, %p98
    %s101 = sadd.s32 %s100, 1
    %p104 = scmp.eq.s32.totalorder %s10, 1
    %p105 = scmp.ne.s32.totalorder %s100, %s102
    %p106 = scmp.eq.s32.totalorder %s10, 0
    %p107 = por %p105, %p106
    %p108 = scmp.ne.s32.totalorder %s100, %s102
    %p109 = scmp.eq.s32.totalorder %s15, 1
    %p110 = por %p108, %p109
    %p111 = scmp.ne.s32.totalorder %s102, %s103
    %p112 = scmp.eq.s32.totalorder %s15, 0
    %p113 = por %p111, %p112
    %p114 = scmp.ne.s32.totalorder %s102, %s103
    %p115 = scmp.eq.s32.totalorder %s16, 1
    %p116 = por %p114, %p115
    %p118 = scmp.ne.s32.totalorder %s103, %s117
    %p119 = scmp.eq.s32.totalorder %s16, 0
    %p120 = por %p118, %p119
    %s121 = ssub.s32 %s17, %s29
    %s122 = ssub.s32 %s18, %s25
    %s123 = sor.u32 %s121, %s122
    %p124 = scmp.eq.s32.totalorder %s123, 0
    %s126 = sadd.s32 %s125, 1
    %s127 = scalar_select %p124, %s125, %s126
    %p130 = pneg %p124
    %p131 = scmp.eq.s32.totalorder %s10, 1
    %p132 = por %p130, %p131
    %p133 = scmp.ne.s32.totalorder %s125, %s128
    %p134 = scmp.eq.s32.totalorder %s10, 0
    %p135 = por %p133, %p134
    %p136 = scmp.ne.s32.totalorder %s125, %s128
    %p137 = scmp.eq.s32.totalorder %s15, 1
    %p138 = por %p136, %p137
    %p139 = scmp.ne.s32.totalorder %s128, %s129
    %p140 = scmp.eq.s32.totalorder %s15, 0
    %p141 = por %p139, %p140
    %p142 = scmp.ne.s32.totalorder %s128, %s129
    %p143 = scmp.eq.s32.totalorder %s16, 1
    %p144 = por %p142, %p143
    %p146 = scmp.ne.s32.totalorder %s129, %s145
    %p147 = scmp.eq.s32.totalorder %s16, 0
    %p148 = por %p146, %p147
    %p149 = scmp.le.s32.totalorder 1, %s10
    %p150 = scmp.lt.s32.totalorder %s10, 3
    %p151 = pnand %p149, %p150
    %p152 = pneg %p151
    // Predicated region
    $region9: #{unet_grid_gating_signal3_forward.3} parent=5 // pred_check
      _
    $region10: #{unet_grid_gating_signal3_forward.3} parent=5 // pred_check_branch
      %154 = sbr.rel (%p151) target = $region12
    $region11: #{unet_grid_gating_signal3_forward.3} parent=5 // pred_region
      %s155 = ssub.s32 %s10, 1
      // Predicated region
      $region13: #{unet_grid_gating_signal3_forward.3} parent=11 // pred_check
        %p156 = pneg %p71
      $region14: #{unet_grid_gating_signal3_forward.3} parent=11 // pred_check_branch
        %158 = sbr.rel (%p156) target = $region16
      $region15: #{unet_grid_gating_signal3_forward.3} parent=11 // pred_region
        _
      $region16: #{unet_grid_gating_signal3_forward.3} parent=11 // pred_fallthru
        _
      // Predicated region
      $region17: #{unet_grid_gating_signal3_forward.3} parent=11 // pred_check
        %p159 = pneg %p92
      $region18: #{unet_grid_gating_signal3_forward.3} parent=11 // pred_check_branch
        %161 = sbr.rel (%p159) target = $region20
      $region19: #{unet_grid_gating_signal3_forward.3} parent=11 // pred_region
        _
      $region20: #{unet_grid_gating_signal3_forward.3} parent=11 // pred_fallthru
        _
      // Predicated region
      $region21: #{unet_grid_gating_signal3_forward.3} parent=11 // pred_check
        %p162 = pneg %p113
      $region22: #{unet_grid_gating_signal3_forward.3} parent=11 // pred_check_branch
        %164 = sbr.rel (%p162) target = $region24
      $region23: #{unet_grid_gating_signal3_forward.3} parent=11 // pred_region
        _
      $region24: #{unet_grid_gating_signal3_forward.3} parent=11 // pred_fallthru
        _
    $region12: #{unet_grid_gating_signal3_forward.3} parent=5 // pred_fallthru
      _
    %p165 = scmp.lt.s32.totalorder %s10, 2
    // Predicated region
    $region25: #{unet_grid_gating_signal3_forward.3} parent=5 // pred_check
      %p166 = pneg %p165
    $region26: #{unet_grid_gating_signal3_forward.3} parent=5 // pred_check_branch
      %168 = sbr.rel (%p166) target = $region28
    $region27: #{unet_grid_gating_signal3_forward.3} parent=5 // pred_region
      // Predicated region
      $region29: #{unet_grid_gating_signal3_forward.3} parent=27 // pred_check
        %p169 = pneg %p44
      $region30: #{unet_grid_gating_signal3_forward.3} parent=27 // pred_check_branch
        %171 = sbr.rel (%p169) target = $region32
      $region31: #{unet_grid_gating_signal3_forward.3} parent=27 // pred_region
        %s172 = smul.u32 3, %s18
        %p173 = scmp.lt.s32.totalorder %s17, 1
        %s174 = scalar_select %p173, %s17, 1
        %p175 = scmp.lt.s32.totalorder %s172, 2
        %s176 = scalar_select %p175, %s172, 2
        %s177 = smul.addr %s174, 3
        %s178 = sadd.s32 %s176, %s177
        %s179 = smul.addr %s178, 8
        %s180 = scalar_lea.vmem %s0, %s179
        %s181 = smul.u32 3, %s18
      $region32: #{unet_grid_gating_signal3_forward.3} parent=27 // pred_fallthru
        _
    $region28: #{unet_grid_gating_signal3_forward.3} parent=5 // pred_fallthru
      _
    %p182 = scmp.le.s32.totalorder 1, %s10
    %p183 = scmp.lt.s32.totalorder %s10, 3
    %p184 = pnand %p182, %p183
    %p185 = pneg %p184
    // Predicated region
    $region33: #{unet_grid_gating_signal3_forward.3} parent=5 // pred_check
      _
    $region34: #{unet_grid_gating_signal3_forward.3} parent=5 // pred_check_branch
      %187 = sbr.rel (%p184) target = $region36
    $region35: #{unet_grid_gating_signal3_forward.3} parent=5 // pred_region
      %s188 = ssub.s32 %s10, 1
      %s189 = smul.u32 3, %s20
      %p190 = scmp.lt.s32.totalorder %s19, 1
      %s191 = scalar_select %p190, %s19, 1
      %p192 = scmp.lt.s32.totalorder %s189, 2
      %s193 = scalar_select %p192, %s189, 2
      %s194 = smul.addr %s191, 3
      %s195 = sadd.s32 %s193, %s194
      %s196 = smul.addr %s195, 8
      %s197 = scalar_lea.vmem %s0, %s196
      %p198 = pneg %p50
      %p199 = pneg %p47
      %p200 = pneg %p71
      %p201 = pneg %p68
      %p202 = pneg %p92
      %p203 = pneg %p89
      %p204 = pneg %p113
      %p205 = pneg %p110
      %p206 = pneg %p141
      %p207 = pneg %p138
      %s208 = smul.u32 3, %s20
      %p209 = scmp.lt.s32.totalorder %s19, 1
      %s210 = scalar_select %p209, %s19, 1
      %p211 = scmp.lt.s32.totalorder %s208, 2
      %s212 = scalar_select %p211, %s208, 2
      %s213 = smul.addr %s210, 3
      %s214 = sadd.s32 %s212, %s213
      %s215 = smul.addr %s214, 4
      %s216 = scalar_lea.vmem %s4, %s215
      %s217 = smul.u32 3, %s20
      %p218 = scmp.lt.s32.totalorder %s19, 1
      %s219 = scalar_select %p218, %s19, 1
      %p220 = scmp.lt.s32.totalorder %s217, 2
      %s221 = scalar_select %p220, %s217, 2
      %s222 = smul.addr %s219, 3
      %s223 = sadd.s32 %s221, %s222
      %s224 = smul.addr %s223, 8
      %s225 = scalar_lea.vmem %s0, %s224
      %s226 = smul.u32 3, %s20
      %s227 = smul.u32 3, %s20
      %p228 = scmp.lt.s32.totalorder %s19, 1
      %s229 = scalar_select %p228, %s19, 1
      %p230 = scmp.lt.s32.totalorder %s227, 2
      %s231 = scalar_select %p230, %s227, 2
      %s232 = smul.addr %s229, 3
      %s233 = sadd.s32 %s231, %s232
      %s234 = smul.addr %s233, 4
      %s235 = scalar_lea.vmem %s4, %s234
      %s236 = smul.u32 3, %s20
      %v238 = vld [vmem:[%s1] sm:$0x3]
      %v239 = vld [vmem:[%s225] sm:$0xff]
      %v240 = vld [vmem:[%s225 + $0x8] sm:$0xff]
      %v241 = vld [vmem:[%s225 + $0x10] sm:$0xff]
      %v242 = vpack.c.bf16 %v239, %v239
      %v243 = vpack.c.bf16 %v240, %v240
      %v244 = vpack.c.bf16 %v241, %v241
      %vm245 = vcmask 64512
      %v247 = vsel %vm245, %v238, 0
      %vm249 = vcmask 1043456
      %v251 = vsel %vm249, %v242, 0
      %v254 = vsel %vm249, %v243, 0
      %v257 = vsel %vm249, %v244, 0
      %259 = vmatprep.subr.bf16.mxu0 0
      %260 = vmatpush1.bf16.msra.mxu0 0
      %261 = vmatprep.subr.bf16.mxu0 0
      %262 = vmatpush1.bf16.msra.mxu0 0
      %263 = vmatprep.subr.bf16.mxu0 0
      %264 = vmatpush1.bf16.msra.mxu0 0
      %265 = vmatprep.subr.bf16.mxu0 0
      %266 = vmatpush1.bf16.msra.mxu0 0
      %267 = vmatprep.subr.bf16.mxu0 0
      %268 = vmatpush1.bf16.msra.mxu0 0
      %269 = vmatprep.subr.bf16.mxu0 0
      %270 = vmatpush1.bf16.msra.mxu0 0
      %271 = vmatprep.subr.bf16.mxu0 0
      %272 = vmatpush1.bf16.msra.mxu0 0
      %273 = vmatprep.subr.bf16.mxu0 %v254
      %274 = vmatpush1.bf16.msra.mxu0 %v251
      %275 = vmatprep.subr.bf16.mxu0 0
      %276 = vmatpush2.bf16.msra.mxu0 0
      %277 = vmatprep.subr.bf16.mxu0 0
      %278 = vmatpush2.bf16.msra.mxu0 0
      %279 = vmatprep.subr.bf16.mxu0 0
      %280 = vmatpush2.bf16.msra.mxu0 0
      %281 = vmatprep.subr.bf16.mxu0 0
      %282 = vmatpush2.bf16.msra.mxu0 0
      %283 = vmatprep.subr.bf16.mxu0 0
      %284 = vmatpush2.bf16.msra.mxu0 0
      %285 = vmatprep.subr.bf16.mxu0 0
      %286 = vmatpush2.bf16.msra.mxu0 0
      %287 = vmatprep.subr.bf16.mxu0 0
      %288 = vmatpush2.bf16.msra.mxu0 0
      %289 = vmatprep.subr.bf16.mxu0 0
      %290 = vmatpush2.bf16.msra.mxu0 0
      %291 = vmatprep.mubr.bf16.mxu0 0
      %292 = vmatmul.mubr.bf16.gmra.mxu0 %v247
      %v293 = vpop.f32.mrf.mxu0
      %v294 = vadd.f32 0.0, %v293
      %v295 = vpop.f32.mrf.mxu0
      %v296 = vadd.f32 0.0, %v295
      %v297 = vpop.f32.mrf.mxu0
      %v298 = vpop.f32.mrf.mxu0
      %299 = vdwg.mxu0
      %300 = vmatprep.subr.bf16.mxu0 0
      %301 = vmatpush1.bf16.msra.mxu0 0
      %302 = vmatprep.subr.bf16.mxu0 0
      %303 = vmatpush1.bf16.msra.mxu0 0
      %304 = vmatprep.subr.bf16.mxu0 0
      %305 = vmatpush1.bf16.msra.mxu0 0
      %306 = vmatprep.subr.bf16.mxu0 0
      %307 = vmatpush1.bf16.msra.mxu0 0
      %308 = vmatprep.subr.bf16.mxu0 0
      %309 = vmatpush1.bf16.msra.mxu0 0
      %310 = vmatprep.subr.bf16.mxu0 0
      %311 = vmatpush1.bf16.msra.mxu0 0
      %312 = vmatprep.subr.bf16.mxu0 0
      %313 = vmatpush1.bf16.msra.mxu0 0
      %314 = vmatprep.subr.bf16.mxu0 0
      %315 = vmatpush1.bf16.msra.mxu0 %v257
      %316 = vmatprep.subr.bf16.mxu0 0
      %317 = vmatpush2.bf16.msra.mxu0 0
      %318 = vmatprep.subr.bf16.mxu0 0
      %319 = vmatpush2.bf16.msra.mxu0 0
      %320 = vmatprep.subr.bf16.mxu0 0
      %321 = vmatpush2.bf16.msra.mxu0 0
      %322 = vmatprep.subr.bf16.mxu0 0
      %323 = vmatpush2.bf16.msra.mxu0 0
      %324 = vmatprep.subr.bf16.mxu0 0
      %325 = vmatpush2.bf16.msra.mxu0 0
      %326 = vmatprep.subr.bf16.mxu0 0
      %327 = vmatpush2.bf16.msra.mxu0 0
      %328 = vmatprep.subr.bf16.mxu0 0
      %329 = vmatpush2.bf16.msra.mxu0 0
      %330 = vmatprep.subr.bf16.mxu0 0
      %331 = vmatpush2.bf16.msra.mxu0 0
      %332 = vmatprep.mubr.bf16.mxu0 0
      %333 = vmatmul.mubr.bf16.gmra.mxu0 %v247
      %v334 = vpop.f32.mrf.mxu0
      %v335 = vadd.f32 0.0, %v334
      %v336 = vpop.f32.mrf.mxu0
      %v337 = vpop.f32.mrf.mxu0
      %v338 = vpop.f32.mrf.mxu0
      %339 = vdwg.mxu0
      %v340 = vld [vmem:[%s2] sm:$0xf]
      %342 = vset.pattern.permute.xlu0 0
      %343 = vperm.xlu0 %342, %v340
      %v344 = vpop.permute.xlu0 %343
      %v346 = vmul.f32 %v294, %v344
      %v347 = vmul.f32 %v296, %v344
      %v348 = vmul.f32 %v335, %v344
      %v349 = vld [vmem:[%s3] sm:$0xf]
      %351 = vset.pattern.permute.xlu0 0
      %352 = vperm.xlu0 %351, %v349
      %v353 = vpop.permute.xlu0 %352
      %v355 = vadd.f32 %v346, %v353
      %v356 = vadd.f32 %v347, %v353
      %v357 = vadd.f32 %v348, %v353
      %v358 = vmax.f32 %v355, 0.0
      %v359 = vmax.f32 %v356, 0.0
      %v360 = vmax.f32 %v357, 0.0
      %v363 = vcombine.low %v358, %v359
      %365 = vst [vmem:[%s235] sm:$0xff] %v363
      %366 = vst [vmem:[%s235 + $0x8] sm:$0xf] %v360
      %s367 = smul.u32 3, %s20
      %p368 = scmp.lt.s32.totalorder %s19, 1
      %s369 = scalar_select %p368, %s19, 1
      %p370 = scmp.lt.s32.totalorder %s367, 2
      %s371 = scalar_select %p370, %s367, 2
      %s372 = smul.addr %s369, 3
      %s373 = sadd.s32 %s371, %s372
      %s374 = smul.addr %s373, 4
      %s375 = scalar_lea.vmem %s4, %s374
      // Predicated region
      $region37: #{unet_grid_gating_signal3_forward.3} parent=35 // pred_check
        %p376 = pneg %p138
      $region38: #{unet_grid_gating_signal3_forward.3} parent=35 // pred_check_branch
        %378 = sbr.rel (%p376) target = $region40
      $region39: #{unet_grid_gating_signal3_forward.3} parent=35 // pred_region
        %s379 = smul.u32 3, %s20
      $region40: #{unet_grid_gating_signal3_forward.3} parent=35 // pred_fallthru
        _
    $region36: #{unet_grid_gating_signal3_forward.3} parent=5 // pred_fallthru
      _
    %p380 = scmp.le.s32.totalorder 2, %s10
    // Predicated region
    $region41: #{unet_grid_gating_signal3_forward.3} parent=5 // pred_check
      %p381 = pneg %p380
    $region42: #{unet_grid_gating_signal3_forward.3} parent=5 // pred_check_branch
      %383 = sbr.rel (%p381) target = $region44
    $region43: #{unet_grid_gating_signal3_forward.3} parent=5 // pred_region
      %s384 = ssub.s32 %s10, 2
      // Predicated region
      $region45: #{unet_grid_gating_signal3_forward.3} parent=43 // pred_check
        %p385 = pneg %p144
      $region46: #{unet_grid_gating_signal3_forward.3} parent=43 // pred_check_branch
        %387 = sbr.rel (%p385) target = $region48
      $region47: #{unet_grid_gating_signal3_forward.3} parent=43 // pred_region
        %s388 = smul.u32 3, %s22
        %p389 = scmp.lt.s32.totalorder %s21, 1
        %s390 = scalar_select %p389, %s21, 1
        %p391 = scmp.lt.s32.totalorder %s388, 2
        %s392 = scalar_select %p391, %s388, 2
        %s393 = smul.addr %s390, 3
        %s394 = sadd.s32 %s392, %s393
        %s395 = smul.addr %s394, 4
        %s396 = scalar_lea.vmem %s4, %s395
      $region48: #{unet_grid_gating_signal3_forward.3} parent=43 // pred_fallthru
        _
    $region44: #{unet_grid_gating_signal3_forward.3} parent=5 // pred_fallthru
      _
  $region6: #{unet_grid_gating_signal3_forward.3} parent=0 // loop_footer
    %s14 = sadd.s32 1, %s10
  $region7: #{unet_grid_gating_signal3_forward.3} parent=0 // loop_footer_branch
    %9 = sbr.rel target = $region3
  $region8: #{unet_grid_gating_signal3_forward.3} parent=0 // loop_exit
    _

// kernel: unet_grid_gating_signal3_forward.2
$region0: #{unet_grid_gating_signal3_forward.2}
  #allocation0 [shape = 'u32[]', space=smem, size = 0x4, offset = 0x4, fixed_abs, tag = 'smem constant byte address 0x4 - core index']
  #allocation1 [shape = 'u32[144,128]{1,0:T(1,128)}', space=vmem, size = 0x12000, scoped, tag = 'internal scratch']
  %s0 = inlined_call_operand.vmem [shape: f32[2,8,384], index: 0, kind: input, shape index: {}]
  %s1 = inlined_call_operand.vmem [shape: bf16[4,8], index: 1, kind: input, shape index: {}]
  %s2 = inlined_call_operand.vmem [shape: f32[2,4,2], index: 2, kind: output, shape index: {}]
  %s3 = sld [smem:[#allocation0]]
  $region45: #{unet_grid_gating_signal3_forward.2} parent=0
    _
  %s5 = ssub.s32 1, %s3
  %s6 = scalar_select 0, %s5, %s3
  loop: start=0, step=1, limit=4
  $region2: #{unet_grid_gating_signal3_forward.2} parent=0 // loop_pre_header
    _
  $region3: #{unet_grid_gating_signal3_forward.2} parent=0 // loop_header
    %s8 = sphi 0, %s12
    %p9 = scmp.ge.s32.totalorder %s8, 4
    %s15 = sphi 0, %s27
    %s16 = sphi 0, %s23
    %s17 = sphi 0, %s15
    %s18 = sphi 0, %s16
    %s19 = sphi 0, %s17
    %s20 = sphi 0, %s18
    %s32 = sphi 0, %s34
    %s35 = sphi 0, %s32
    %s36 = sphi 0, %s35
    %s52 = sphi 0, %s36
    %s56 = sphi 0, %s56
    %s58 = sphi 0, %s56
    %s59 = sphi 0, %s58
    %s73 = sphi 0, %s59
    %s79 = sphi 0, %s81
    %s82 = sphi 0, %s79
    %s83 = sphi 0, %s82
    %s99 = sphi 0, %s83
  $region4: #{unet_grid_gating_signal3_forward.2} parent=0 // loop_header_branch
    %11 = sbr.rel (%p9) target = $region8
  $region5: #{unet_grid_gating_signal3_forward.2} parent=0 // loop_body
    %s13 = ssub.s32 %s8, 1
    %s14 = ssub.s32 %s8, 2
    %s21 = sadd.s32 1, %s16
    %p22 = scmp.ge.s32.totalorder %s21, 1
    %s23 = scalar_select %p22, 0, %s21
    %s24 = sadd.s32 1, %s15
    %s25 = scalar_select %p22, %s24, %s15
    %p26 = scmp.ge.s32.totalorder %s25, 2
    %s27 = scalar_select %p26, 0, %s25
    %s28 = ssub.s32 %s15, %s27
    %s29 = ssub.s32 %s16, %s23
    %s30 = sor.u32 %s28, %s29
    %p31 = scmp.eq.s32.totalorder %s30, 0
    %s33 = sadd.s32 %s32, 1
    %s34 = scalar_select %p31, %s32, %s33
    %p37 = pneg %p31
    %p38 = scmp.eq.s32.totalorder %s8, 1
    %p39 = por %p37, %p38
    %p40 = scmp.ne.s32.totalorder %s32, %s35
    %p41 = scmp.eq.s32.totalorder %s8, 0
    %p42 = por %p40, %p41
    %p43 = scmp.ne.s32.totalorder %s32, %s35
    %p44 = scmp.eq.s32.totalorder %s13, 1
    %p45 = por %p43, %p44
    %p46 = scmp.ne.s32.totalorder %s35, %s36
    %p47 = scmp.eq.s32.totalorder %s13, 0
    %p48 = por %p46, %p47
    %p49 = scmp.ne.s32.totalorder %s35, %s36
    %p50 = scmp.eq.s32.totalorder %s14, 1
    %p51 = por %p49, %p50
    %p53 = scmp.ne.s32.totalorder %s36, %s52
    %p54 = scmp.eq.s32.totalorder %s14, 0
    %p55 = por %p53, %p54
    %s57 = sadd.s32 %s56, 1
    %p60 = scmp.eq.s32.totalorder %s8, 1
    %p61 = scmp.ne.s32.totalorder %s56, %s58
    %p62 = scmp.eq.s32.totalorder %s8, 0
    %p63 = por %p61, %p62
    %p64 = scmp.ne.s32.totalorder %s56, %s58
    %p65 = scmp.eq.s32.totalorder %s13, 1
    %p66 = por %p64, %p65
    %p67 = scmp.ne.s32.totalorder %s58, %s59
    %p68 = scmp.eq.s32.totalorder %s13, 0
    %p69 = por %p67, %p68
    %p70 = scmp.ne.s32.totalorder %s58, %s59
    %p71 = scmp.eq.s32.totalorder %s14, 1
    %p72 = por %p70, %p71
    %p74 = scmp.ne.s32.totalorder %s59, %s73
    %p75 = scmp.eq.s32.totalorder %s14, 0
    %p76 = por %p74, %p75
    %s77 = ssub.s32 %s15, %s27
    %p78 = scmp.eq.s32.totalorder %s77, 0
    %s80 = sadd.s32 %s79, 1
    %s81 = scalar_select %p78, %s79, %s80
    %p84 = pneg %p78
    %p85 = scmp.eq.s32.totalorder %s8, 1
    %p86 = por %p84, %p85
    %p87 = scmp.ne.s32.totalorder %s79, %s82
    %p88 = scmp.eq.s32.totalorder %s8, 0
    %p89 = por %p87, %p88
    %p90 = scmp.ne.s32.totalorder %s79, %s82
    %p91 = scmp.eq.s32.totalorder %s13, 1
    %p92 = por %p90, %p91
    %p93 = scmp.ne.s32.totalorder %s82, %s83
    %p94 = scmp.eq.s32.totalorder %s13, 0
    %p95 = por %p93, %p94
    %p96 = scmp.ne.s32.totalorder %s82, %s83
    %p97 = scmp.eq.s32.totalorder %s14, 1
    %p98 = por %p96, %p97
    %p100 = scmp.ne.s32.totalorder %s83, %s99
    %p101 = scmp.eq.s32.totalorder %s14, 0
    %p102 = por %p100, %p101
    %p103 = scmp.le.s32.totalorder 1, %s8
    %p104 = scmp.lt.s32.totalorder %s8, 3
    %p105 = pnand %p103, %p104
    %p106 = pneg %p105
    // Predicated region
    $region9: #{unet_grid_gating_signal3_forward.2} parent=5 // pred_check
      _
    $region10: #{unet_grid_gating_signal3_forward.2} parent=5 // pred_check_branch
      %108 = sbr.rel (%p105) target = $region12
    $region11: #{unet_grid_gating_signal3_forward.2} parent=5 // pred_region
      %s109 = ssub.s32 %s8, 1
      // Predicated region
      $region13: #{unet_grid_gating_signal3_forward.2} parent=11 // pred_check
        %p110 = pneg %p69
      $region14: #{unet_grid_gating_signal3_forward.2} parent=11 // pred_check_branch
        %112 = sbr.rel (%p110) target = $region16
      $region15: #{unet_grid_gating_signal3_forward.2} parent=11 // pred_region
        _
      $region16: #{unet_grid_gating_signal3_forward.2} parent=11 // pred_fallthru
        _
    $region12: #{unet_grid_gating_signal3_forward.2} parent=5 // pred_fallthru
      _
    %p113 = scmp.lt.s32.totalorder %s8, 2
    // Predicated region
    $region17: #{unet_grid_gating_signal3_forward.2} parent=5 // pred_check
      %p114 = pneg %p113
    $region18: #{unet_grid_gating_signal3_forward.2} parent=5 // pred_check_branch
      %116 = sbr.rel (%p114) target = $region20
    $region19: #{unet_grid_gating_signal3_forward.2} parent=5 // pred_region
      // Predicated region
      $region21: #{unet_grid_gating_signal3_forward.2} parent=19 // pred_check
        %p117 = pneg %p42
      $region22: #{unet_grid_gating_signal3_forward.2} parent=19 // pred_check_branch
        %119 = sbr.rel (%p117) target = $region24
      $region23: #{unet_grid_gating_signal3_forward.2} parent=19 // pred_region
        %s120 = smul.u32 3, %s16
        %p121 = scmp.lt.s32.totalorder %s15, 1
        %s122 = scalar_select %p121, %s15, 1
        %p123 = scmp.lt.s32.totalorder %s120, 2
        %s124 = scalar_select %p123, %s120, 2
        %s125 = smul.addr %s122, 3
        %s126 = sadd.s32 %s124, %s125
        %s127 = smul.addr %s126, 8
        %s128 = scalar_lea.vmem %s0, %s127
        %s129 = smul.u32 3, %s16
      $region24: #{unet_grid_gating_signal3_forward.2} parent=19 // pred_fallthru
        _
    $region20: #{unet_grid_gating_signal3_forward.2} parent=5 // pred_fallthru
      _
    %p130 = scmp.le.s32.totalorder 1, %s8
    %p131 = scmp.lt.s32.totalorder %s8, 3
    %p132 = pnand %p130, %p131
    %p133 = pneg %p132
    // Predicated region
    $region25: #{unet_grid_gating_signal3_forward.2} parent=5 // pred_check
      _
    $region26: #{unet_grid_gating_signal3_forward.2} parent=5 // pred_check_branch
      %135 = sbr.rel (%p132) target = $region28
    $region27: #{unet_grid_gating_signal3_forward.2} parent=5 // pred_region
      %s136 = ssub.s32 %s8, 1
      %s137 = smul.u32 3, %s18
      %p138 = scmp.lt.s32.totalorder %s17, 1
      %s139 = scalar_select %p138, %s17, 1
      %p140 = scmp.lt.s32.totalorder %s137, 2
      %s141 = scalar_select %p140, %s137, 2
      %s142 = smul.addr %s139, 3
      %s143 = sadd.s32 %s141, %s142
      %s144 = smul.addr %s143, 8
      %s145 = scalar_lea.vmem %s0, %s144
      %p146 = pneg %p48
      %p147 = pneg %p45
      %p148 = pneg %p69
      %p149 = pneg %p66
      %p150 = pneg %p95
      %p151 = pneg %p92
      %p152 = scmp.lt.s32.totalorder %s17, 1
      %s153 = scalar_select %p152, %s17, 1
      %s154 = smul.addr %s153, 4
      %s155 = scalar_lea.vmem %s2, %s154
      %s156 = smul.u32 3, %s18
      %p157 = scmp.lt.s32.totalorder %s17, 1
      %s158 = scalar_select %p157, %s17, 1
      %p159 = scmp.lt.s32.totalorder %s156, 2
      %s160 = scalar_select %p159, %s156, 2
      %s161 = smul.addr %s158, 3
      %s162 = sadd.s32 %s160, %s161
      %s163 = smul.addr %s162, 8
      %s164 = scalar_lea.vmem %s0, %s163
      %s165 = smul.u32 3, %s18
      %p166 = scmp.lt.s32.totalorder %s17, 1
      %s167 = scalar_select %p166, %s17, 1
      %s168 = smul.addr %s167, 4
      %s169 = scalar_lea.vmem %s2, %s168
      %p171 = scmp.eq.s32.totalorder %s18, 0
      // Predicated region
      $region29: #{unet_grid_gating_signal3_forward.2} parent=27 // pred_check
        %p172 = pneg %p171
      $region30: #{unet_grid_gating_signal3_forward.2} parent=27 // pred_check_branch
        %174 = sbr.rel (%p172) target = $region32
      $region31: #{unet_grid_gating_signal3_forward.2} parent=27 // pred_region
        %vm175 = vcmask 11264
        %176 = vst.msk [vmem:[%s169] sm:$0xf] %vm175, 0.0
      $region32: #{unet_grid_gating_signal3_forward.2} parent=27 // pred_fallthru
        _
      %v177 = vld [vmem:[%s1] sm:$0x3]
      %v178 = vld [vmem:[%s164] sm:$0xff]
      %v179 = vld [vmem:[%s164 + $0x8] sm:$0xff]
      %v180 = vld [vmem:[%s164 + $0x10] sm:$0xff]
      %v181 = vpack.c.bf16 %v178, %v178
      %v182 = vpack.c.bf16 %v179, %v179
      %v183 = vpack.c.bf16 %v180, %v180
      %vm184 = vcmask 64512
      %v186 = vsel %vm184, %v177, 0
      %vm188 = vcmask 1043456
      %v190 = vsel %vm188, %v181, 0
      %v193 = vsel %vm188, %v182, 0
      %v196 = vsel %vm188, %v183, 0
      %198 = vmatprep.subr.bf16.mxu0 0
      %199 = vmatpush1.bf16.msra.mxu0 0
      %200 = vmatprep.subr.bf16.mxu0 0
      %201 = vmatpush1.bf16.msra.mxu0 0
      %202 = vmatprep.subr.bf16.mxu0 0
      %203 = vmatpush1.bf16.msra.mxu0 0
      %204 = vmatprep.subr.bf16.mxu0 0
      %205 = vmatpush1.bf16.msra.mxu0 0
      %206 = vmatprep.subr.bf16.mxu0 0
      %207 = vmatpush1.bf16.msra.mxu0 0
      %208 = vmatprep.subr.bf16.mxu0 0
      %209 = vmatpush1.bf16.msra.mxu0 0
      %210 = vmatprep.subr.bf16.mxu0 0
      %211 = vmatpush1.bf16.msra.mxu0 0
      %212 = vmatprep.subr.bf16.mxu0 %v193
      %213 = vmatpush1.bf16.msra.mxu0 %v190
      %214 = vmatprep.subr.bf16.mxu0 0
      %215 = vmatpush2.bf16.msra.mxu0 0
      %216 = vmatprep.subr.bf16.mxu0 0
      %217 = vmatpush2.bf16.msra.mxu0 0
      %218 = vmatprep.subr.bf16.mxu0 0
      %219 = vmatpush2.bf16.msra.mxu0 0
      %220 = vmatprep.subr.bf16.mxu0 0
      %221 = vmatpush2.bf16.msra.mxu0 0
      %222 = vmatprep.subr.bf16.mxu0 0
      %223 = vmatpush2.bf16.msra.mxu0 0
      %224 = vmatprep.subr.bf16.mxu0 0
      %225 = vmatpush2.bf16.msra.mxu0 0
      %226 = vmatprep.subr.bf16.mxu0 0
      %227 = vmatpush2.bf16.msra.mxu0 0
      %228 = vmatprep.subr.bf16.mxu0 0
      %229 = vmatpush2.bf16.msra.mxu0 0
      %230 = vmatprep.mubr.bf16.mxu0 0
      %231 = vmatmul.mubr.bf16.gmra.mxu0 %v186
      %v232 = vpop.f32.mrf.mxu0
      %v233 = vadd.f32 0.0, %v232
      %v234 = vpop.f32.mrf.mxu0
      %v235 = vadd.f32 0.0, %v234
      %v236 = vpop.f32.mrf.mxu0
      %v237 = vpop.f32.mrf.mxu0
      %238 = vdwg.mxu0
      %239 = vmatprep.subr.bf16.mxu0 0
      %240 = vmatpush1.bf16.msra.mxu0 0
      %241 = vmatprep.subr.bf16.mxu0 0
      %242 = vmatpush1.bf16.msra.mxu0 0
      %243 = vmatprep.subr.bf16.mxu0 0
      %244 = vmatpush1.bf16.msra.mxu0 0
      %245 = vmatprep.subr.bf16.mxu0 0
      %246 = vmatpush1.bf16.msra.mxu0 0
      %247 = vmatprep.subr.bf16.mxu0 0
      %248 = vmatpush1.bf16.msra.mxu0 0
      %249 = vmatprep.subr.bf16.mxu0 0
      %250 = vmatpush1.bf16.msra.mxu0 0
      %251 = vmatprep.subr.bf16.mxu0 0
      %252 = vmatpush1.bf16.msra.mxu0 0
      %253 = vmatprep.subr.bf16.mxu0 0
      %254 = vmatpush1.bf16.msra.mxu0 %v196
      %255 = vmatprep.subr.bf16.mxu0 0
      %256 = vmatpush2.bf16.msra.mxu0 0
      %257 = vmatprep.subr.bf16.mxu0 0
      %258 = vmatpush2.bf16.msra.mxu0 0
      %259 = vmatprep.subr.bf16.mxu0 0
      %260 = vmatpush2.bf16.msra.mxu0 0
      %261 = vmatprep.subr.bf16.mxu0 0
      %262 = vmatpush2.bf16.msra.mxu0 0
      %263 = vmatprep.subr.bf16.mxu0 0
      %264 = vmatpush2.bf16.msra.mxu0 0
      %265 = vmatprep.subr.bf16.mxu0 0
      %266 = vmatpush2.bf16.msra.mxu0 0
      %267 = vmatprep.subr.bf16.mxu0 0
      %268 = vmatpush2.bf16.msra.mxu0 0
      %269 = vmatprep.subr.bf16.mxu0 0
      %270 = vmatpush2.bf16.msra.mxu0 0
      %271 = vmatprep.mubr.bf16.mxu0 0
      %272 = vmatmul.mubr.bf16.gmra.mxu0 %v186
      %v273 = vpop.f32.mrf.mxu0
      %v274 = vadd.f32 0.0, %v273
      %v275 = vpop.f32.mrf.mxu0
      %v276 = vpop.f32.mrf.mxu0
      %v277 = vpop.f32.mrf.mxu0
      %278 = vdwg.mxu0
      %v279 = vsel %vm188, %v233, 0.0
      %v280 = vsel %vm188, %v235, 0.0
      %v281 = vadd.f32 %v279, %v280
      %v282 = vsel %vm188, %v274, 0.0
      %v283 = vadd.f32 %v281, %v282
      %284 = vadd.xlane.f32.xlu0 %v283
      %v285 = vpop.xlane.xlu0 %284
      %v286 = vmul.f32 %v233, %v233
      %v287 = vmul.f32 %v235, %v235
      %v288 = vmul.f32 %v274, %v274
      %v289 = vsel %vm188, %v286, 0.0
      %v290 = vsel %vm188, %v287, 0.0
      %v291 = vadd.f32 %v289, %v290
      %v292 = vsel %vm188, %v288, 0.0
      %v293 = vadd.f32 %v291, %v292
      %294 = vadd.xlane.f32.xlu0 %v293
      %v295 = vpop.xlane.xlu0 %294
      %v296 = vld [vmem:[%s169] sm:$0xf]
      %vm297 = vcmask 7168
      %v298 = vsel %vm297, %v285, %v295
      %v299 = vadd.f32 %v296, %v298
      %vm300 = vcmask 11264
      %301 = vst.msk [vmem:[%s169] sm:$0xf] %vm300, %v299
      %p302 = scmp.lt.s32.totalorder %s17, 1
      %s303 = scalar_select %p302, %s17, 1
      %s304 = smul.addr %s303, 4
      %s305 = scalar_lea.vmem %s2, %s304
      // Predicated region
      $region33: #{unet_grid_gating_signal3_forward.2} parent=27 // pred_check
        %p306 = pneg %p92
      $region34: #{unet_grid_gating_signal3_forward.2} parent=27 // pred_check_branch
        %308 = sbr.rel (%p306) target = $region36
      $region35: #{unet_grid_gating_signal3_forward.2} parent=27 // pred_region
        _
      $region36: #{unet_grid_gating_signal3_forward.2} parent=27 // pred_fallthru
        _
    $region28: #{unet_grid_gating_signal3_forward.2} parent=5 // pred_fallthru
      _
    %p309 = scmp.le.s32.totalorder 2, %s8
    // Predicated region
    $region37: #{unet_grid_gating_signal3_forward.2} parent=5 // pred_check
      %p310 = pneg %p309
    $region38: #{unet_grid_gating_signal3_forward.2} parent=5 // pred_check_branch
      %312 = sbr.rel (%p310) target = $region40
    $region39: #{unet_grid_gating_signal3_forward.2} parent=5 // pred_region
      %s313 = ssub.s32 %s8, 2
      // Predicated region
      $region41: #{unet_grid_gating_signal3_forward.2} parent=39 // pred_check
        %p314 = pneg %p98
      $region42: #{unet_grid_gating_signal3_forward.2} parent=39 // pred_check_branch
        %316 = sbr.rel (%p314) target = $region44
      $region43: #{unet_grid_gating_signal3_forward.2} parent=39 // pred_region
        %p317 = scmp.lt.s32.totalorder %s19, 1
        %s318 = scalar_select %p317, %s19, 1
        %s319 = smul.addr %s318, 4
        %s320 = scalar_lea.vmem %s2, %s319
      $region44: #{unet_grid_gating_signal3_forward.2} parent=39 // pred_fallthru
        _
    $region40: #{unet_grid_gating_signal3_forward.2} parent=5 // pred_fallthru
      _
  $region6: #{unet_grid_gating_signal3_forward.2} parent=0 // loop_footer
    %s12 = sadd.s32 1, %s8
  $region7: #{unet_grid_gating_signal3_forward.2} parent=0 // loop_footer_branch
    %7 = sbr.rel target = $region3
  $region8: #{unet_grid_gating_signal3_forward.2} parent=0 // loop_exit
    _

</llo_original>
